<compile_context>
chip_gen: v7x
topology: tpu7x:2x2x1
jax: 0.10.0
libtpu: 0.0.40
codegen_flags: <defaults>
</compile_context>

<pallas_src>
import jax
import jax.numpy as jnp
from jax.experimental import pallas as pl
from jax.experimental.pallas import tpu as pltpu

LANE = 128  # TPU lane width; also the MXU-friendly tile edge we pad to.


def _round_up(x, m):
    return ((x + m - 1) // m) * m


def dqn_kernel(x_ref, w1_ref, b1_ref, w2_ref, b2_ref, w3_ref, b3_ref, out_ref):
    # fc1 + ReLU   (second ReLU of the PyTorch forward is idempotent -> dropped)
    h = jnp.dot(x_ref[...], w1_ref[...], preferred_element_type=jnp.float32)
    h = jnp.maximum(h + b1_ref[...], 0.0)
    # fc2 + ReLU
    h = jnp.dot(h, w2_ref[...], preferred_element_type=jnp.float32)
    h = jnp.maximum(h + b2_ref[...], 0.0)
    # fc3 (no activation)
    out = jnp.dot(h, w3_ref[...], preferred_element_type=jnp.float32) + b3_ref[...]
    out_ref[...] = out.astype(out_ref.dtype)


def dqn_forward(x, w1, b1, w2, b2, w3, b3, *, tm=128):
    """x: (B, S); w1: (S, H); b1: (1, H); w2: (H, H); b2: (1, H);
    w3: (H, A); b3: (1, A).  Returns (B, A) fp32."""
    B, S = x.shape
    H = w1.shape[1]
    A = w3.shape[1]

    # Lane-dense / MXU-friendly padded sizes.
    Sp = _round_up(S, LANE)
    Hp = _round_up(H, LANE)
    Ap = _round_up(A, LANE)
    Bp = _round_up(B, tm)

    f32 = jnp.float32
    xp = jnp.pad(x.astype(f32), ((0, Bp - B), (0, Sp - S)))
    w1p = jnp.pad(w1.astype(f32), ((0, Sp - S), (0, Hp - H)))
    b1p = jnp.pad(b1.astype(f32), ((0, 0), (0, Hp - H)))
    w2p = jnp.pad(w2.astype(f32), ((0, Hp - H), (0, Hp - H)))
    b2p = jnp.pad(b2.astype(f32), ((0, 0), (0, Hp - H)))
    w3p = jnp.pad(w3.astype(f32), ((0, Hp - H), (0, Ap - A)))
    b3p = jnp.pad(b3.astype(f32), ((0, 0), (0, Ap - A)))

    grid = (Bp // tm,)

    # Weights/biases: constant index_map -> stay resident in VMEM across steps.
    const2 = lambda i: (0, 0)
    in_specs = [
        pl.BlockSpec((tm, Sp), lambda i: (i, 0)),   # x tile, walks the batch
        pl.BlockSpec((Sp, Hp), const2),             # w1
        pl.BlockSpec((1, Hp), const2),              # b1
        pl.BlockSpec((Hp, Hp), const2),             # w2
        pl.BlockSpec((1, Hp), const2),              # b2
        pl.BlockSpec((Hp, Ap), const2),             # w3
        pl.BlockSpec((1, Ap), const2),              # b3
    ]
    out_spec = pl.BlockSpec((tm, Ap), lambda i: (i, 0))  # lane-dense output slab

    flops = 2 * Bp * (Sp * Hp + Hp * Hp + Hp * Ap)
    bytes_accessed = 4 * (
        Bp * Sp + Sp * Hp + Hp + Hp * Hp + Hp + Hp * Ap + Ap + Bp * Ap
    )

    out_padded = pl.pallas_call(
        dqn_kernel,
        out_shape=jax.ShapeDtypeStruct((Bp, Ap), jnp.float32),
        grid=grid,
        in_specs=in_specs,
        out_specs=out_spec,
        compiler_params=pltpu.CompilerParams(
            dimension_semantics=("parallel",),  # lets v7x split batch tiles over 2 TCs
        ),
        cost_estimate=pl.CostEstimate(
            flops=flops, transcendentals=0, bytes_accessed=bytes_accessed
        ),
    )(xp, w1p, b1p, w2p, b2p, w3p, b3p)

    # Slice the logical result back out of the lane-dense padded slab.
    return out_padded[:B, :A]


def init_params(key, state_dim, action_dim, hidden):
    # Deterministic synthetic init (roughly matching nn.Linear's uniform scale).
    ks = jax.random.split(key, 6)

    def lin(kw, kb, fan_in, fan_out):
        bound = 1.0 / jnp.sqrt(fan_in)
        w = jax.random.uniform(kw, (fan_in, fan_out), jnp.float32, -bound, bound)
        b = jax.random.uniform(kb, (1, fan_out), jnp.float32, -bound, bound)
        return w, b

    w1, b1 = lin(ks[0], ks[1], state_dim, hidden)
    w2, b2 = lin(ks[2], ks[3], hidden, hidden)
    w3, b3 = lin(ks[4], ks[5], hidden, action_dim)
    return w1, b1, w2, b2, w3, b3


if __name__ == "__main__":
    batch, state_dim, action_dim, hidden = 8, 4, 2, 32

    key = jax.random.PRNGKey(0)
    kx, kp = jax.random.split(key)
    x = jax.random.normal(kx, (batch, state_dim), jnp.float32)
    w1, b1, w2, b2, w3, b3 = init_params(kp, state_dim, action_dim, hidden)

    out = dqn_forward(x, w1, b1, w2, b2, w3, b3)
    out = jax.block_until_ready(out)

    # Pure-JAX reference (matches the PyTorch forward; extra ReLU is idempotent).
    h = jnp.maximum(x @ w1 + b1, 0.0)
    h = jnp.maximum(h, 0.0)
    h = jnp.maximum(h @ w2 + b2, 0.0)
    ref = h @ w3 + b3

    assert out.shape == (batch, action_dim)
    assert jnp.allclose(out, ref, atol=1e-5, rtol=1e-5)

    print("KERNEL_OK")
</pallas_src>

<mosaic_0001>
module attributes {stable_mosaic.version = 11 : i64} {
  func.func @dqn_kernel(%arg0: i32, %arg1: memref<128x128xf32, #tpu.memory_space<vmem>>, %arg2: memref<128x128xf32, #tpu.memory_space<vmem>>, %arg3: memref<1x128xf32, #tpu.memory_space<vmem>>, %arg4: memref<128x128xf32, #tpu.memory_space<vmem>>, %arg5: memref<1x128xf32, #tpu.memory_space<vmem>>, %arg6: memref<128x128xf32, #tpu.memory_space<vmem>>, %arg7: memref<1x128xf32, #tpu.memory_space<vmem>>, %arg8: memref<128x128xf32, #tpu.memory_space<vmem>>) attributes {dimension_semantics = [#tpu.dimension_semantics<parallel>], iteration_bounds = array<i64: 1>, scalar_prefetch = 0 : i64, scratch_operands = 0 : i64, tpu.core_type = #tpu.core_type<tc>, window_params = [{transform_indices = @transform_0, window_bounds = array<i64: 128, 128>}, {pipeline_mode = #tpu.pipeline_mode<synchronous>, transform_indices = @transform_1, window_bounds = array<i64: 128, 128>}, {pipeline_mode = #tpu.pipeline_mode<synchronous>, transform_indices = @transform_2, window_bounds = array<i64: 1, 128>}, {pipeline_mode = #tpu.pipeline_mode<synchronous>, transform_indices = @transform_3, window_bounds = array<i64: 128, 128>}, {pipeline_mode = #tpu.pipeline_mode<synchronous>, transform_indices = @transform_4, window_bounds = array<i64: 1, 128>}, {pipeline_mode = #tpu.pipeline_mode<synchronous>, transform_indices = @transform_5, window_bounds = array<i64: 128, 128>}, {pipeline_mode = #tpu.pipeline_mode<synchronous>, transform_indices = @transform_6, window_bounds = array<i64: 1, 128>}, {transform_indices = @transform_7, window_bounds = array<i64: 128, 128>}]} {
    %c0 = arith.constant 0 : index
    %c0_0 = arith.constant 0 : index
    %0 = vector.load %arg1[%c0, %c0_0] : memref<128x128xf32, #tpu.memory_space<vmem>>, vector<128x128xf32>
    %c0_1 = arith.constant 0 : index
    %c0_2 = arith.constant 0 : index
    %1 = vector.load %arg2[%c0_1, %c0_2] : memref<128x128xf32, #tpu.memory_space<vmem>>, vector<128x128xf32>
    %cst = arith.constant dense<0.000000e+00> : vector<128x128xf32>
    %2 = tpu.matmul %0, %1, %cst {dimension_numbers = #tpu.dot_dimension_numbers<[1], [0], [0], [1], [0, 0, 1, 1], [], []>} : vector<128x128xf32>, vector<128x128xf32>, vector<128x128xf32> -> vector<128x128xf32>
    %c0_3 = arith.constant 0 : index
    %c0_4 = arith.constant 0 : index
    %3 = vector.load %arg3[%c0_3, %c0_4] : memref<1x128xf32, #tpu.memory_space<vmem>>, vector<1x128xf32>
    %4 = vector.broadcast %3 : vector<1x128xf32> to vector<128x128xf32>
    %5 = arith.addf %2, %4 : vector<128x128xf32>
    %cst_5 = arith.constant 0.000000e+00 : f32
    %6 = vector.broadcast %cst_5 : f32 to vector<128x128xf32>
    %7 = arith.maximumf %5, %6 : vector<128x128xf32>
    %c0_6 = arith.constant 0 : index
    %c0_7 = arith.constant 0 : index
    %8 = vector.load %arg4[%c0_6, %c0_7] : memref<128x128xf32, #tpu.memory_space<vmem>>, vector<128x128xf32>
    %cst_8 = arith.constant dense<0.000000e+00> : vector<128x128xf32>
    %9 = tpu.matmul %7, %8, %cst_8 {dimension_numbers = #tpu.dot_dimension_numbers<[1], [0], [0], [1], [0, 0, 1, 1], [], []>} : vector<128x128xf32>, vector<128x128xf32>, vector<128x128xf32> -> vector<128x128xf32>
    %c0_9 = arith.constant 0 : index
    %c0_10 = arith.constant 0 : index
    %10 = vector.load %arg5[%c0_9, %c0_10] : memref<1x128xf32, #tpu.memory_space<vmem>>, vector<1x128xf32>
    %11 = vector.broadcast %10 : vector<1x128xf32> to vector<128x128xf32>
    %12 = arith.addf %9, %11 : vector<128x128xf32>
    %cst_11 = arith.constant 0.000000e+00 : f32
    %13 = vector.broadcast %cst_11 : f32 to vector<128x128xf32>
    %14 = arith.maximumf %12, %13 : vector<128x128xf32>
    %c0_12 = arith.constant 0 : index
    %c0_13 = arith.constant 0 : index
    %15 = vector.load %arg6[%c0_12, %c0_13] : memref<128x128xf32, #tpu.memory_space<vmem>>, vector<128x128xf32>
    %cst_14 = arith.constant dense<0.000000e+00> : vector<128x128xf32>
    %16 = tpu.matmul %14, %15, %cst_14 {dimension_numbers = #tpu.dot_dimension_numbers<[1], [0], [0], [1], [0, 0, 1, 1], [], []>} : vector<128x128xf32>, vector<128x128xf32>, vector<128x128xf32> -> vector<128x128xf32>
    %c0_15 = arith.constant 0 : index
    %c0_16 = arith.constant 0 : index
    %17 = vector.load %arg7[%c0_15, %c0_16] : memref<1x128xf32, #tpu.memory_space<vmem>>, vector<1x128xf32>
    %18 = vector.broadcast %17 : vector<1x128xf32> to vector<128x128xf32>
    %19 = arith.addf %16, %18 : vector<128x128xf32>
    %c0_17 = arith.constant 0 : index
    %c0_18 = arith.constant 0 : index
    %20 = vector.load %arg8[%c0_17, %c0_18] : memref<128x128xf32, #tpu.memory_space<vmem>>, vector<128x128xf32>
    tpu.vector_store %arg8[%c0_17, %c0_18], %19 {strides = array<i32>} : memref<128x128xf32, #tpu.memory_space<vmem>>, vector<128x128xf32>,
    return
  }
  func.func @transform_0(%arg0: i32) -> (i32, i32) {
    %c0_i32 = arith.constant 0 : i32
    %c0_i32_0 = arith.constant 0 : i32
    return %arg0, %c0_i32 : i32, i32
  }
  func.func @transform_1(%arg0: i32) -> (i32, i32) {
    %c0_i32 = arith.constant 0 : i32
    %c0_i32_0 = arith.constant 0 : i32
    %c0_i32_1 = arith.constant 0 : i32
    return %c0_i32, %c0_i32_0 : i32, i32
  }
  func.func @transform_2(%arg0: i32) -> (i32, i32) {
    %c0_i32 = arith.constant 0 : i32
    %c0_i32_0 = arith.constant 0 : i32
    %c0_i32_1 = arith.constant 0 : i32
    return %c0_i32, %c0_i32_0 : i32, i32
  }
  func.func @transform_3(%arg0: i32) -> (i32, i32) {
    %c0_i32 = arith.constant 0 : i32
    %c0_i32_0 = arith.constant 0 : i32
    %c0_i32_1 = arith.constant 0 : i32
    return %c0_i32, %c0_i32_0 : i32, i32
  }
  func.func @transform_4(%arg0: i32) -> (i32, i32) {
    %c0_i32 = arith.constant 0 : i32
    %c0_i32_0 = arith.constant 0 : i32
    %c0_i32_1 = arith.constant 0 : i32
    return %c0_i32, %c0_i32_0 : i32, i32
  }
  func.func @transform_5(%arg0: i32) -> (i32, i32) {
    %c0_i32 = arith.constant 0 : i32
    %c0_i32_0 = arith.constant 0 : i32
    %c0_i32_1 = arith.constant 0 : i32
    return %c0_i32, %c0_i32_0 : i32, i32
  }
  func.func @transform_6(%arg0: i32) -> (i32, i32) {
    %c0_i32 = arith.constant 0 : i32
    %c0_i32_0 = arith.constant 0 : i32
    %c0_i32_1 = arith.constant 0 : i32
    return %c0_i32, %c0_i32_0 : i32, i32
  }
  func.func @transform_7(%arg0: i32) -> (i32, i32) {
    %c0_i32 = arith.constant 0 : i32
    %c0_i32_0 = arith.constant 0 : i32
    return %arg0, %c0_i32 : i32, i32
  }
}

</mosaic_0001>

<llo_original>
// kernel: tpu_custom_call.1
$region0: #{tpu_custom_call.1}
  #allocation0 [shape = 'u32[]', space=smem, size = 0x4, offset = 0x4, fixed_abs, tag = 'smem constant byte address 0x4 - core index']
  #allocation1 [shape = 'u32[144,128]{1,0:T(1,128)}', space=vmem, size = 0x12000, scoped, tag = 'internal scratch']
  %s0 = inlined_call_operand.hbm [shape: f32[128,128], index: 0, kind: input, shape index: {}]
  %s1 = inlined_call_operand.hbm [shape: f32[128,128], index: 1, kind: input, shape index: {}]
  %s2 = inlined_call_operand.vmem [shape: f32[1,128], index: 2, kind: input, shape index: {}]
  %s3 = inlined_call_operand.hbm [shape: f32[128,128], index: 3, kind: input, shape index: {}]
  %s4 = inlined_call_operand.vmem [shape: f32[1,128], index: 4, kind: input, shape index: {}]
  %s5 = inlined_call_operand.hbm [shape: f32[128,128], index: 5, kind: input, shape index: {}]
  %s6 = inlined_call_operand.vmem [shape: f32[1,128], index: 6, kind: input, shape index: {}]
  %s7 = inlined_call_operand.hbm [shape: f32[128,128], index: 7, kind: output, shape index: {}]
  %s8 = sld [smem:[#allocation0]]
  $region54: #{tpu_custom_call.1} parent=0
    _
  %s10 = ssub.s32 1, %s8
  %s11 = scalar_select 0, %s10, %s8
  $region1: #{tpu_custom_call.1} parent=0
    #allocation2 [shape = 'u8[65536]{0}', space=vmem, size = 0x10000, scoped, tag = 'input window, operand 0, single buffered']
    #allocation3 [shape = 's32[1]{0}', space=sflag, size = 0x4, scoped, tag = 'scoped memory for tpu_custom_call.1']
    #allocation4 [shape = 's32[1]{0}', space=sflag, size = 0x4, scoped, tag = 'scoped memory for tpu_custom_call.1']
    #allocation5 [shape = 'u8[65536]{0}', space=vmem, size = 0x10000, scoped, tag = 'input window, operand 1, single buffered']
    #allocation6 [shape = 's32[1]{0}', space=sflag, size = 0x4, scoped, tag = 'scoped memory for tpu_custom_call.1']
    #allocation7 [shape = 'u8[65536]{0}', space=vmem, size = 0x10000, scoped, tag = 'input window, operand 3, single buffered']
    #allocation8 [shape = 'u8[65536]{0}', space=vmem, size = 0x10000, scoped, tag = 'input window, operand 5, single buffered']
    #allocation9 [shape = 's32[1]{0}', space=sflag, size = 0x4, scoped, tag = 'scoped memory for tpu_custom_call.1']
    #allocation10 [shape = 'u8[65536]{0}', space=vmem, size = 0x10000, scoped, tag = 'output window, operand 0, single buffered']
    %12 = vsyncpa [#allocation3], 0
    %13 = vsyncpa [#allocation6], 0
    %14 = vsyncpa [#allocation9], 0
    %15 = vsyncpa [#allocation4], 0
    // Predicated region
    $region2: #{tpu_custom_call.1} parent=1 // pred_check
      _
    $region3: #{tpu_custom_call.1} parent=1 // pred_check_branch
      %17 = sbr.rel (0) target = $region5
    $region4: #{tpu_custom_call.1} parent=1 // pred_region
      %s19 = ssub.s32 2048, 2048
      %20 = vsyncadd [#allocation3], %s19
      %s21 = sshll.u32 [#allocation2], 4
      %s22 = int_to_ptr.vmem [resolvable:$true] %s21
      %27 = dma.hbm_to_vmem [thread:$0]  %s0, 2048, %s22, [#allocation3], 128, 128, 8
    $region5: #{tpu_custom_call.1} parent=1 // pred_fallthru
      _
    // Predicated region
    $region6: #{tpu_custom_call.1} parent=1 // pred_check
      _
    $region7: #{tpu_custom_call.1} parent=1 // pred_check_branch
      %29 = sbr.rel (0) target = $region9
    $region8: #{tpu_custom_call.1} parent=1 // pred_region
      %s31 = ssub.s32 2048, 2048
      %32 = vsyncadd [#allocation6], %s31
      %s33 = sshll.u32 [#allocation5], 4
      %s34 = int_to_ptr.vmem [resolvable:$true] %s33
      %39 = dma.hbm_to_vmem [thread:$0]  %s1, 2048, %s34, [#allocation6], 128, 128, 8
    $region9: #{tpu_custom_call.1} parent=1 // pred_fallthru
      _
    // Predicated region
    $region10: #{tpu_custom_call.1} parent=1 // pred_check
      _
    $region11: #{tpu_custom_call.1} parent=1 // pred_check_branch
      %41 = sbr.rel (0) target = $region13
    $region12: #{tpu_custom_call.1} parent=1 // pred_region
      _
    $region13: #{tpu_custom_call.1} parent=1 // pred_fallthru
      _
    // Predicated region
    $region14: #{tpu_custom_call.1} parent=1 // pred_check
      _
    $region15: #{tpu_custom_call.1} parent=1 // pred_check_branch
      %43 = sbr.rel (0) target = $region17
    $region16: #{tpu_custom_call.1} parent=1 // pred_region
      %s45 = ssub.s32 2048, 2048
      %46 = vsyncadd [#allocation6], %s45
      %s47 = sshll.u32 [#allocation7], 4
      %s48 = int_to_ptr.vmem [resolvable:$true] %s47
      %53 = dma.hbm_to_vmem [thread:$0]  %s3, 2048, %s48, [#allocation6], 128, 128, 8
    $region17: #{tpu_custom_call.1} parent=1 // pred_fallthru
      _
    // Predicated region
    $region18: #{tpu_custom_call.1} parent=1 // pred_check
      _
    $region19: #{tpu_custom_call.1} parent=1 // pred_check_branch
      %55 = sbr.rel (0) target = $region21
    $region20: #{tpu_custom_call.1} parent=1 // pred_region
      _
    $region21: #{tpu_custom_call.1} parent=1 // pred_fallthru
      _
    // Predicated region
    $region22: #{tpu_custom_call.1} parent=1 // pred_check
      _
    $region23: #{tpu_custom_call.1} parent=1 // pred_check_branch
      %57 = sbr.rel (0) target = $region25
    $region24: #{tpu_custom_call.1} parent=1 // pred_region
      %s59 = ssub.s32 2048, 2048
      %60 = vsyncadd [#allocation9], %s59
      %s61 = sshll.u32 [#allocation8], 4
      %s62 = int_to_ptr.vmem [resolvable:$true] %s61
      %67 = dma.hbm_to_vmem [thread:$0]  %s5, 2048, %s62, [#allocation9], 128, 128, 8
    $region25: #{tpu_custom_call.1} parent=1 // pred_fallthru
      _
    // Predicated region
    $region26: #{tpu_custom_call.1} parent=1 // pred_check
      _
    $region27: #{tpu_custom_call.1} parent=1 // pred_check_branch
      %69 = sbr.rel (0) target = $region29
    $region28: #{tpu_custom_call.1} parent=1 // pred_region
      _
    $region29: #{tpu_custom_call.1} parent=1 // pred_fallthru
      _
    // Predicated region
    $region30: #{tpu_custom_call.1} parent=1 // pred_check
      _
    $region31: #{tpu_custom_call.1} parent=1 // pred_check_branch
      %71 = sbr.rel (0) target = $region33
    $region32: #{tpu_custom_call.1} parent=1 // pred_region
      %72 = dma.done [#allocation3], 2048
    $region33: #{tpu_custom_call.1} parent=1 // pred_fallthru
      _
    // Predicated region
    $region34: #{tpu_custom_call.1} parent=1 // pred_check
      _
    $region35: #{tpu_custom_call.1} parent=1 // pred_check_branch
      %74 = sbr.rel (0) target = $region37
    $region36: #{tpu_custom_call.1} parent=1 // pred_region
      %75 = dma.done [#allocation6], 2048
    $region37: #{tpu_custom_call.1} parent=1 // pred_fallthru
      _
    // Predicated region
    $region38: #{tpu_custom_call.1} parent=1 // pred_check
      _
    $region39: #{tpu_custom_call.1} parent=1 // pred_check_branch
      %77 = sbr.rel (0) target = $region41
    $region40: #{tpu_custom_call.1} parent=1 // pred_region
      %78 = dma.done [#allocation6], 2048
    $region41: #{tpu_custom_call.1} parent=1 // pred_fallthru
      _
    // Predicated region
    $region42: #{tpu_custom_call.1} parent=1 // pred_check
      _
    $region43: #{tpu_custom_call.1} parent=1 // pred_check_branch
      %80 = sbr.rel (0) target = $region45
    $region44: #{tpu_custom_call.1} parent=1 // pred_region
      %81 = dma.done [#allocation9], 2048
    $region45: #{tpu_custom_call.1} parent=1 // pred_fallthru
      _
    %v82 = vld [vmem:[#allocation2] sm:$0xff]
    %v83 = vld [vmem:[#allocation2 + $0x8] sm:$0xff]
    %v84 = vld [vmem:[#allocation2 + $0x10] sm:$0xff]
    %v85 = vld [vmem:[#allocation2 + $0x18] sm:$0xff]
    %v86 = vld [vmem:[#allocation2 + $0x20] sm:$0xff]
    %v87 = vld [vmem:[#allocation2 + $0x28] sm:$0xff]
    %v88 = vld [vmem:[#allocation2 + $0x30] sm:$0xff]
    %v89 = vld [vmem:[#allocation2 + $0x38] sm:$0xff]
    %v90 = vld [vmem:[#allocation2 + $0x40] sm:$0xff]
    %v91 = vld [vmem:[#allocation2 + $0x48] sm:$0xff]
    %v92 = vld [vmem:[#allocation2 + $0x50] sm:$0xff]
    %v93 = vld [vmem:[#allocation2 + $0x58] sm:$0xff]
    %v94 = vld [vmem:[#allocation2 + $0x60] sm:$0xff]
    %v95 = vld [vmem:[#allocation2 + $0x68] sm:$0xff]
    %v96 = vld [vmem:[#allocation2 + $0x70] sm:$0xff]
    %v97 = vld [vmem:[#allocation2 + $0x78] sm:$0xff]
    %v98 = vld [vmem:[#allocation5] sm:$0xff]
    %v99 = vld [vmem:[#allocation5 + $0x8] sm:$0xff]
    %v100 = vld [vmem:[#allocation5 + $0x10] sm:$0xff]
    %v101 = vld [vmem:[#allocation5 + $0x18] sm:$0xff]
    %v102 = vld [vmem:[#allocation5 + $0x20] sm:$0xff]
    %v103 = vld [vmem:[#allocation5 + $0x28] sm:$0xff]
    %v104 = vld [vmem:[#allocation5 + $0x30] sm:$0xff]
    %v105 = vld [vmem:[#allocation5 + $0x38] sm:$0xff]
    %v106 = vld [vmem:[#allocation5 + $0x40] sm:$0xff]
    %v107 = vld [vmem:[#allocation5 + $0x48] sm:$0xff]
    %v108 = vld [vmem:[#allocation5 + $0x50] sm:$0xff]
    %v109 = vld [vmem:[#allocation5 + $0x58] sm:$0xff]
    %v110 = vld [vmem:[#allocation5 + $0x60] sm:$0xff]
    %v111 = vld [vmem:[#allocation5 + $0x68] sm:$0xff]
    %v112 = vld [vmem:[#allocation5 + $0x70] sm:$0xff]
    %v113 = vld [vmem:[#allocation5 + $0x78] sm:$0xff]
    %v114 = vld [vmem:[%s2] sm:$0x1]
    %v116 = vlaneseq
    %v117 = vshrl.u32 %v116, 7
    %v118 = vsub.s32 0, %v117
    %v119 = vrot.slane %v114, %v118
    %121 = vmatprep.subr.mxu0 0.0
    %122 = vmatpush1.msra.mxu0 %v98
    %123 = vmatprep.subr.mxu0 0.0
    %124 = vmatpush1.msra.mxu0 %v99
    %125 = vmatprep.subr.mxu0 0.0
    %126 = vmatpush1.msra.mxu0 %v100
    %127 = vmatprep.subr.mxu0 0.0
    %128 = vmatpush1.msra.mxu0 %v101
    %129 = vmatprep.subr.mxu0 0.0
    %130 = vmatpush1.msra.mxu0 %v102
    %131 = vmatprep.subr.mxu0 0.0
    %132 = vmatpush1.msra.mxu0 %v103
    %133 = vmatprep.subr.mxu0 0.0
    %134 = vmatpush1.msra.mxu0 %v104
    %135 = vmatprep.subr.mxu0 0.0
    %136 = vmatpush1.msra.mxu0 %v105
    %137 = vmatprep.subr.mxu0 0.0
    %138 = vmatpush1.msra.mxu0 %v106
    %139 = vmatprep.subr.mxu0 0.0
    %140 = vmatpush1.msra.mxu0 %v107
    %141 = vmatprep.subr.mxu0 0.0
    %142 = vmatpush1.msra.mxu0 %v108
    %143 = vmatprep.subr.mxu0 0.0
    %144 = vmatpush1.msra.mxu0 %v109
    %145 = vmatprep.subr.mxu0 0.0
    %146 = vmatpush1.msra.mxu0 %v110
    %147 = vmatprep.subr.mxu0 0.0
    %148 = vmatpush1.msra.mxu0 %v111
    %149 = vmatprep.subr.mxu0 0.0
    %150 = vmatpush1.msra.mxu0 %v112
    %151 = vmatprep.subr.mxu0 0.0
    %152 = vmatpush1.msra.mxu0 %v113
    %153 = vmatprep.subr.mxu0 0.0
    %154 = vmatpush1.msra.mxu0 0.0
    %155 = vmatprep.subr.mxu0 0.0
    %156 = vmatpush1.msra.mxu0 0.0
    %157 = vmatprep.subr.mxu0 0.0
    %158 = vmatpush1.msra.mxu0 0.0
    %159 = vmatprep.subr.mxu0 0.0
    %160 = vmatpush1.msra.mxu0 0.0
    %161 = vmatprep.subr.mxu0 0.0
    %162 = vmatpush1.msra.mxu0 0.0
    %163 = vmatprep.subr.mxu0 0.0
    %164 = vmatpush1.msra.mxu0 0.0
    %165 = vmatprep.subr.mxu0 0.0
    %166 = vmatpush1.msra.mxu0 0.0
    %167 = vmatprep.subr.mxu0 0.0
    %168 = vmatpush1.msra.mxu0 0.0
    %169 = vmatprep.subr.mxu0 0.0
    %170 = vmatpush1.msra.mxu0 0.0
    %171 = vmatprep.subr.mxu0 0.0
    %172 = vmatpush1.msra.mxu0 0.0
    %173 = vmatprep.subr.mxu0 0.0
    %174 = vmatpush1.msra.mxu0 0.0
    %175 = vmatprep.subr.mxu0 0.0
    %176 = vmatpush1.msra.mxu0 0.0
    %177 = vmatprep.subr.mxu0 0.0
    %178 = vmatpush1.msra.mxu0 0.0
    %179 = vmatprep.subr.mxu0 0.0
    %180 = vmatpush1.msra.mxu0 0.0
    %181 = vmatprep.subr.mxu0 0.0
    %182 = vmatpush1.msra.mxu0 0.0
    %183 = vmatprep.subr.mxu0 0.0
    %184 = vmatpush1.msra.mxu0 0.0
    %185 = vmatprep.mubr.f32.mxu0 0.0
    %186 = vmatmul.mubr.f32.gmra.mrb[0].mxu0 %v82
    %v187 = vpop.f32.mrb[0].mxu0
    %v188 = vadd.f32 %v119, %v187
    %v189 = vpop.f32.mrb[0].mxu0
    %190 = vmatprep.mubr.f32.mxu0 0.0
    %191 = vmatmul.mubr.f32.gmra.mrb[0].mxu0 %v83
    %v192 = vpop.f32.mrb[0].mxu0
    %v193 = vadd.f32 %v119, %v192
    %v194 = vpop.f32.mrb[0].mxu0
    %195 = vmatprep.mubr.f32.mxu0 0.0
    %196 = vmatmul.mubr.f32.gmra.mrb[0].mxu0 %v84
    %v197 = vpop.f32.mrb[0].mxu0
    %v198 = vadd.f32 %v119, %v197
    %v199 = vpop.f32.mrb[0].mxu0
    %200 = vmatprep.mubr.f32.mxu0 0.0
    %201 = vmatmul.mubr.f32.gmra.mrb[0].mxu0 %v85
    %v202 = vpop.f32.mrb[0].mxu0
    %v203 = vadd.f32 %v119, %v202
    %v204 = vpop.f32.mrb[0].mxu0
    %205 = vmatprep.mubr.f32.mxu0 0.0
    %206 = vmatmul.mubr.f32.gmra.mrb[0].mxu0 %v86
    %v207 = vpop.f32.mrb[0].mxu0
    %v208 = vadd.f32 %v119, %v207
    %v209 = vpop.f32.mrb[0].mxu0
    %210 = vmatprep.mubr.f32.mxu0 0.0
    %211 = vmatmul.mubr.f32.gmra.mrb[0].mxu0 %v87
    %v212 = vpop.f32.mrb[0].mxu0
    %v213 = vadd.f32 %v119, %v212
    %v214 = vpop.f32.mrb[0].mxu0
    %215 = vmatprep.mubr.f32.mxu0 0.0
    %216 = vmatmul.mubr.f32.gmra.mrb[0].mxu0 %v88
    %v217 = vpop.f32.mrb[0].mxu0
    %v218 = vadd.f32 %v119, %v217
    %v219 = vpop.f32.mrb[0].mxu0
    %220 = vmatprep.mubr.f32.mxu0 0.0
    %221 = vmatmul.mubr.f32.gmra.mrb[0].mxu0 %v89
    %v222 = vpop.f32.mrb[0].mxu0
    %v223 = vadd.f32 %v119, %v222
    %v224 = vpop.f32.mrb[0].mxu0
    %225 = vmatprep.mubr.f32.mxu0 0.0
    %226 = vmatmul.mubr.f32.gmra.mrb[0].mxu0 %v90
    %v227 = vpop.f32.mrb[0].mxu0
    %v228 = vadd.f32 %v119, %v227
    %v229 = vpop.f32.mrb[0].mxu0
    %230 = vmatprep.mubr.f32.mxu0 0.0
    %231 = vmatmul.mubr.f32.gmra.mrb[0].mxu0 %v91
    %v232 = vpop.f32.mrb[0].mxu0
    %v233 = vadd.f32 %v119, %v232
    %v234 = vpop.f32.mrb[0].mxu0
    %235 = vmatprep.mubr.f32.mxu0 0.0
    %236 = vmatmul.mubr.f32.gmra.mrb[0].mxu0 %v92
    %v237 = vpop.f32.mrb[0].mxu0
    %v238 = vadd.f32 %v119, %v237
    %v239 = vpop.f32.mrb[0].mxu0
    %240 = vmatprep.mubr.f32.mxu0 0.0
    %241 = vmatmul.mubr.f32.gmra.mrb[0].mxu0 %v93
    %v242 = vpop.f32.mrb[0].mxu0
    %v243 = vadd.f32 %v119, %v242
    %v244 = vpop.f32.mrb[0].mxu0
    %245 = vmatprep.mubr.f32.mxu0 0.0
    %246 = vmatmul.mubr.f32.gmra.mrb[0].mxu0 %v94
    %v247 = vpop.f32.mrb[0].mxu0
    %v248 = vadd.f32 %v119, %v247
    %v249 = vpop.f32.mrb[0].mxu0
    %250 = vmatprep.mubr.f32.mxu0 0.0
    %251 = vmatmul.mubr.f32.gmra.mrb[0].mxu0 %v95
    %v252 = vpop.f32.mrb[0].mxu0
    %v253 = vadd.f32 %v119, %v252
    %v254 = vpop.f32.mrb[0].mxu0
    %255 = vmatprep.mubr.f32.mxu0 0.0
    %256 = vmatmul.mubr.f32.gmra.mrb[0].mxu0 %v96
    %v257 = vpop.f32.mrb[0].mxu0
    %v258 = vadd.f32 %v119, %v257
    %v259 = vpop.f32.mrb[0].mxu0
    %260 = vmatprep.mubr.f32.mxu0 0.0
    %261 = vmatmul.mubr.f32.gmra.mrb[0].mxu0 %v97
    %v262 = vpop.f32.mrb[0].mxu0
    %v263 = vadd.f32 %v119, %v262
    %v264 = vpop.f32.mrb[0].mxu0
    %265 = vdwg.mxu0
    %v266 = vmax.f32 %v188, 0.0
    %v267 = vmax.f32 %v193, 0.0
    %v268 = vmax.f32 %v198, 0.0
    %v269 = vmax.f32 %v203, 0.0
    %v270 = vmax.f32 %v208, 0.0
    %v271 = vmax.f32 %v213, 0.0
    %v272 = vmax.f32 %v218, 0.0
    %v273 = vmax.f32 %v223, 0.0
    %v274 = vmax.f32 %v228, 0.0
    %v275 = vmax.f32 %v233, 0.0
    %v276 = vmax.f32 %v238, 0.0
    %v277 = vmax.f32 %v243, 0.0
    %v278 = vmax.f32 %v248, 0.0
    %v279 = vmax.f32 %v253, 0.0
    %v280 = vmax.f32 %v258, 0.0
    %v281 = vmax.f32 %v263, 0.0
    %v282 = vld [vmem:[#allocation7] sm:$0xff]
    %v283 = vld [vmem:[#allocation7 + $0x8] sm:$0xff]
    %v284 = vld [vmem:[#allocation7 + $0x10] sm:$0xff]
    %v285 = vld [vmem:[#allocation7 + $0x18] sm:$0xff]
    %v286 = vld [vmem:[#allocation7 + $0x20] sm:$0xff]
    %v287 = vld [vmem:[#allocation7 + $0x28] sm:$0xff]
    %v288 = vld [vmem:[#allocation7 + $0x30] sm:$0xff]
    %v289 = vld [vmem:[#allocation7 + $0x38] sm:$0xff]
    %v290 = vld [vmem:[#allocation7 + $0x40] sm:$0xff]
    %v291 = vld [vmem:[#allocation7 + $0x48] sm:$0xff]
    %v292 = vld [vmem:[#allocation7 + $0x50] sm:$0xff]
    %v293 = vld [vmem:[#allocation7 + $0x58] sm:$0xff]
    %v294 = vld [vmem:[#allocation7 + $0x60] sm:$0xff]
    %v295 = vld [vmem:[#allocation7 + $0x68] sm:$0xff]
    %v296 = vld [vmem:[#allocation7 + $0x70] sm:$0xff]
    %v297 = vld [vmem:[#allocation7 + $0x78] sm:$0xff]
    %v298 = vld [vmem:[%s4] sm:$0x1]
    %v300 = vlaneseq
    %v301 = vshrl.u32 %v300, 7
    %v302 = vsub.s32 0, %v301
    %v303 = vrot.slane %v298, %v302
    %305 = vmatprep.subr.mxu0 0.0
    %306 = vmatpush1.msra.mxu0 %v282
    %307 = vmatprep.subr.mxu0 0.0
    %308 = vmatpush1.msra.mxu0 %v283
    %309 = vmatprep.subr.mxu0 0.0
    %310 = vmatpush1.msra.mxu0 %v284
    %311 = vmatprep.subr.mxu0 0.0
    %312 = vmatpush1.msra.mxu0 %v285
    %313 = vmatprep.subr.mxu0 0.0
    %314 = vmatpush1.msra.mxu0 %v286
    %315 = vmatprep.subr.mxu0 0.0
    %316 = vmatpush1.msra.mxu0 %v287
    %317 = vmatprep.subr.mxu0 0.0
    %318 = vmatpush1.msra.mxu0 %v288
    %319 = vmatprep.subr.mxu0 0.0
    %320 = vmatpush1.msra.mxu0 %v289
    %321 = vmatprep.subr.mxu0 0.0
    %322 = vmatpush1.msra.mxu0 %v290
    %323 = vmatprep.subr.mxu0 0.0
    %324 = vmatpush1.msra.mxu0 %v291
    %325 = vmatprep.subr.mxu0 0.0
    %326 = vmatpush1.msra.mxu0 %v292
    %327 = vmatprep.subr.mxu0 0.0
    %328 = vmatpush1.msra.mxu0 %v293
    %329 = vmatprep.subr.mxu0 0.0
    %330 = vmatpush1.msra.mxu0 %v294
    %331 = vmatprep.subr.mxu0 0.0
    %332 = vmatpush1.msra.mxu0 %v295
    %333 = vmatprep.subr.mxu0 0.0
    %334 = vmatpush1.msra.mxu0 %v296
    %335 = vmatprep.subr.mxu0 0.0
    %336 = vmatpush1.msra.mxu0 %v297
    %337 = vmatprep.subr.mxu0 0.0
    %338 = vmatpush1.msra.mxu0 0.0
    %339 = vmatprep.subr.mxu0 0.0
    %340 = vmatpush1.msra.mxu0 0.0
    %341 = vmatprep.subr.mxu0 0.0
    %342 = vmatpush1.msra.mxu0 0.0
    %343 = vmatprep.subr.mxu0 0.0
    %344 = vmatpush1.msra.mxu0 0.0
    %345 = vmatprep.subr.mxu0 0.0
    %346 = vmatpush1.msra.mxu0 0.0
    %347 = vmatprep.subr.mxu0 0.0
    %348 = vmatpush1.msra.mxu0 0.0
    %349 = vmatprep.subr.mxu0 0.0
    %350 = vmatpush1.msra.mxu0 0.0
    %351 = vmatprep.subr.mxu0 0.0
    %352 = vmatpush1.msra.mxu0 0.0
    %353 = vmatprep.subr.mxu0 0.0
    %354 = vmatpush1.msra.mxu0 0.0
    %355 = vmatprep.subr.mxu0 0.0
    %356 = vmatpush1.msra.mxu0 0.0
    %357 = vmatprep.subr.mxu0 0.0
    %358 = vmatpush1.msra.mxu0 0.0
    %359 = vmatprep.subr.mxu0 0.0
    %360 = vmatpush1.msra.mxu0 0.0
    %361 = vmatprep.subr.mxu0 0.0
    %362 = vmatpush1.msra.mxu0 0.0
    %363 = vmatprep.subr.mxu0 0.0
    %364 = vmatpush1.msra.mxu0 0.0
    %365 = vmatprep.subr.mxu0 0.0
    %366 = vmatpush1.msra.mxu0 0.0
    %367 = vmatprep.subr.mxu0 0.0
    %368 = vmatpush1.msra.mxu0 0.0
    %369 = vmatprep.mubr.f32.mxu0 0.0
    %370 = vmatmul.mubr.f32.gmra.mrb[0].mxu0 %v266
    %v371 = vpop.f32.mrb[0].mxu0
    %v372 = vadd.f32 %v303, %v371
    %v373 = vpop.f32.mrb[0].mxu0
    %374 = vmatprep.mubr.f32.mxu0 0.0
    %375 = vmatmul.mubr.f32.gmra.mrb[0].mxu0 %v267
    %v376 = vpop.f32.mrb[0].mxu0
    %v377 = vadd.f32 %v303, %v376
    %v378 = vpop.f32.mrb[0].mxu0
    %379 = vmatprep.mubr.f32.mxu0 0.0
    %380 = vmatmul.mubr.f32.gmra.mrb[0].mxu0 %v268
    %v381 = vpop.f32.mrb[0].mxu0
    %v382 = vadd.f32 %v303, %v381
    %v383 = vpop.f32.mrb[0].mxu0
    %384 = vmatprep.mubr.f32.mxu0 0.0
    %385 = vmatmul.mubr.f32.gmra.mrb[0].mxu0 %v269
    %v386 = vpop.f32.mrb[0].mxu0
    %v387 = vadd.f32 %v303, %v386
    %v388 = vpop.f32.mrb[0].mxu0
    %389 = vmatprep.mubr.f32.mxu0 0.0
    %390 = vmatmul.mubr.f32.gmra.mrb[0].mxu0 %v270
    %v391 = vpop.f32.mrb[0].mxu0
    %v392 = vadd.f32 %v303, %v391
    %v393 = vpop.f32.mrb[0].mxu0
    %394 = vmatprep.mubr.f32.mxu0 0.0
    %395 = vmatmul.mubr.f32.gmra.mrb[0].mxu0 %v271
    %v396 = vpop.f32.mrb[0].mxu0
    %v397 = vadd.f32 %v303, %v396
    %v398 = vpop.f32.mrb[0].mxu0
    %399 = vmatprep.mubr.f32.mxu0 0.0
    %400 = vmatmul.mubr.f32.gmra.mrb[0].mxu0 %v272
    %v401 = vpop.f32.mrb[0].mxu0
    %v402 = vadd.f32 %v303, %v401
    %v403 = vpop.f32.mrb[0].mxu0
    %404 = vmatprep.mubr.f32.mxu0 0.0
    %405 = vmatmul.mubr.f32.gmra.mrb[0].mxu0 %v273
    %v406 = vpop.f32.mrb[0].mxu0
    %v407 = vadd.f32 %v303, %v406
    %v408 = vpop.f32.mrb[0].mxu0
    %409 = vmatprep.mubr.f32.mxu0 0.0
    %410 = vmatmul.mubr.f32.gmra.mrb[0].mxu0 %v274
    %v411 = vpop.f32.mrb[0].mxu0
    %v412 = vadd.f32 %v303, %v411
    %v413 = vpop.f32.mrb[0].mxu0
    %414 = vmatprep.mubr.f32.mxu0 0.0
    %415 = vmatmul.mubr.f32.gmra.mrb[0].mxu0 %v275
    %v416 = vpop.f32.mrb[0].mxu0
    %v417 = vadd.f32 %v303, %v416
    %v418 = vpop.f32.mrb[0].mxu0
    %419 = vmatprep.mubr.f32.mxu0 0.0
    %420 = vmatmul.mubr.f32.gmra.mrb[0].mxu0 %v276
    %v421 = vpop.f32.mrb[0].mxu0
    %v422 = vadd.f32 %v303, %v421
    %v423 = vpop.f32.mrb[0].mxu0
    %424 = vmatprep.mubr.f32.mxu0 0.0
    %425 = vmatmul.mubr.f32.gmra.mrb[0].mxu0 %v277
    %v426 = vpop.f32.mrb[0].mxu0
    %v427 = vadd.f32 %v303, %v426
    %v428 = vpop.f32.mrb[0].mxu0
    %429 = vmatprep.mubr.f32.mxu0 0.0
    %430 = vmatmul.mubr.f32.gmra.mrb[0].mxu0 %v278
    %v431 = vpop.f32.mrb[0].mxu0
    %v432 = vadd.f32 %v303, %v431
    %v433 = vpop.f32.mrb[0].mxu0
    %434 = vmatprep.mubr.f32.mxu0 0.0
    %435 = vmatmul.mubr.f32.gmra.mrb[0].mxu0 %v279
    %v436 = vpop.f32.mrb[0].mxu0
    %v437 = vadd.f32 %v303, %v436
    %v438 = vpop.f32.mrb[0].mxu0
    %439 = vmatprep.mubr.f32.mxu0 0.0
    %440 = vmatmul.mubr.f32.gmra.mrb[0].mxu0 %v280
    %v441 = vpop.f32.mrb[0].mxu0
    %v442 = vadd.f32 %v303, %v441
    %v443 = vpop.f32.mrb[0].mxu0
    %444 = vmatprep.mubr.f32.mxu0 0.0
    %445 = vmatmul.mubr.f32.gmra.mrb[0].mxu0 %v281
    %v446 = vpop.f32.mrb[0].mxu0
    %v447 = vadd.f32 %v303, %v446
    %v448 = vpop.f32.mrb[0].mxu0
    %449 = vdwg.mxu0
    %v450 = vmax.f32 %v372, 0.0
    %v451 = vmax.f32 %v377, 0.0
    %v452 = vmax.f32 %v382, 0.0
    %v453 = vmax.f32 %v387, 0.0
    %v454 = vmax.f32 %v392, 0.0
    %v455 = vmax.f32 %v397, 0.0
    %v456 = vmax.f32 %v402, 0.0
    %v457 = vmax.f32 %v407, 0.0
    %v458 = vmax.f32 %v412, 0.0
    %v459 = vmax.f32 %v417, 0.0
    %v460 = vmax.f32 %v422, 0.0
    %v461 = vmax.f32 %v427, 0.0
    %v462 = vmax.f32 %v432, 0.0
    %v463 = vmax.f32 %v437, 0.0
    %v464 = vmax.f32 %v442, 0.0
    %v465 = vmax.f32 %v447, 0.0
    %v466 = vld [vmem:[#allocation8] sm:$0xff]
    %v467 = vld [vmem:[#allocation8 + $0x8] sm:$0xff]
    %v468 = vld [vmem:[#allocation8 + $0x10] sm:$0xff]
    %v469 = vld [vmem:[#allocation8 + $0x18] sm:$0xff]
    %v470 = vld [vmem:[#allocation8 + $0x20] sm:$0xff]
    %v471 = vld [vmem:[#allocation8 + $0x28] sm:$0xff]
    %v472 = vld [vmem:[#allocation8 + $0x30] sm:$0xff]
    %v473 = vld [vmem:[#allocation8 + $0x38] sm:$0xff]
    %v474 = vld [vmem:[#allocation8 + $0x40] sm:$0xff]
    %v475 = vld [vmem:[#allocation8 + $0x48] sm:$0xff]
    %v476 = vld [vmem:[#allocation8 + $0x50] sm:$0xff]
    %v477 = vld [vmem:[#allocation8 + $0x58] sm:$0xff]
    %v478 = vld [vmem:[#allocation8 + $0x60] sm:$0xff]
    %v479 = vld [vmem:[#allocation8 + $0x68] sm:$0xff]
    %v480 = vld [vmem:[#allocation8 + $0x70] sm:$0xff]
    %v481 = vld [vmem:[#allocation8 + $0x78] sm:$0xff]
    %v482 = vld [vmem:[%s6] sm:$0x1]
    %v484 = vlaneseq
    %v485 = vshrl.u32 %v484, 7
    %v486 = vsub.s32 0, %v485
    %v487 = vrot.slane %v482, %v486
    %489 = vmatprep.subr.mxu0 0.0
    %490 = vmatpush1.msra.mxu0 %v466
    %491 = vmatprep.subr.mxu0 0.0
    %492 = vmatpush1.msra.mxu0 %v467
    %493 = vmatprep.subr.mxu0 0.0
    %494 = vmatpush1.msra.mxu0 %v468
    %495 = vmatprep.subr.mxu0 0.0
    %496 = vmatpush1.msra.mxu0 %v469
    %497 = vmatprep.subr.mxu0 0.0
    %498 = vmatpush1.msra.mxu0 %v470
    %499 = vmatprep.subr.mxu0 0.0
    %500 = vmatpush1.msra.mxu0 %v471
    %501 = vmatprep.subr.mxu0 0.0
    %502 = vmatpush1.msra.mxu0 %v472
    %503 = vmatprep.subr.mxu0 0.0
    %504 = vmatpush1.msra.mxu0 %v473
    %505 = vmatprep.subr.mxu0 0.0
    %506 = vmatpush1.msra.mxu0 %v474
    %507 = vmatprep.subr.mxu0 0.0
    %508 = vmatpush1.msra.mxu0 %v475
    %509 = vmatprep.subr.mxu0 0.0
    %510 = vmatpush1.msra.mxu0 %v476
    %511 = vmatprep.subr.mxu0 0.0
    %512 = vmatpush1.msra.mxu0 %v477
    %513 = vmatprep.subr.mxu0 0.0
    %514 = vmatpush1.msra.mxu0 %v478
    %515 = vmatprep.subr.mxu0 0.0
    %516 = vmatpush1.msra.mxu0 %v479
    %517 = vmatprep.subr.mxu0 0.0
    %518 = vmatpush1.msra.mxu0 %v480
    %519 = vmatprep.subr.mxu0 0.0
    %520 = vmatpush1.msra.mxu0 %v481
    %521 = vmatprep.subr.mxu0 0.0
    %522 = vmatpush1.msra.mxu0 0.0
    %523 = vmatprep.subr.mxu0 0.0
    %524 = vmatpush1.msra.mxu0 0.0
    %525 = vmatprep.subr.mxu0 0.0
    %526 = vmatpush1.msra.mxu0 0.0
    %527 = vmatprep.subr.mxu0 0.0
    %528 = vmatpush1.msra.mxu0 0.0
    %529 = vmatprep.subr.mxu0 0.0
    %530 = vmatpush1.msra.mxu0 0.0
    %531 = vmatprep.subr.mxu0 0.0
    %532 = vmatpush1.msra.mxu0 0.0
    %533 = vmatprep.subr.mxu0 0.0
    %534 = vmatpush1.msra.mxu0 0.0
    %535 = vmatprep.subr.mxu0 0.0
    %536 = vmatpush1.msra.mxu0 0.0
    %537 = vmatprep.subr.mxu0 0.0
    %538 = vmatpush1.msra.mxu0 0.0
    %539 = vmatprep.subr.mxu0 0.0
    %540 = vmatpush1.msra.mxu0 0.0
    %541 = vmatprep.subr.mxu0 0.0
    %542 = vmatpush1.msra.mxu0 0.0
    %543 = vmatprep.subr.mxu0 0.0
    %544 = vmatpush1.msra.mxu0 0.0
    %545 = vmatprep.subr.mxu0 0.0
    %546 = vmatpush1.msra.mxu0 0.0
    %547 = vmatprep.subr.mxu0 0.0
    %548 = vmatpush1.msra.mxu0 0.0
    %549 = vmatprep.subr.mxu0 0.0
    %550 = vmatpush1.msra.mxu0 0.0
    %551 = vmatprep.subr.mxu0 0.0
    %552 = vmatpush1.msra.mxu0 0.0
    %553 = vmatprep.mubr.f32.mxu0 0.0
    %554 = vmatmul.mubr.f32.gmra.mrb[0].mxu0 %v450
    %v555 = vpop.f32.mrb[0].mxu0
    %v556 = vadd.f32 %v487, %v555
    %v557 = vpop.f32.mrb[0].mxu0
    %558 = vmatprep.mubr.f32.mxu0 0.0
    %559 = vmatmul.mubr.f32.gmra.mrb[0].mxu0 %v451
    %v560 = vpop.f32.mrb[0].mxu0
    %v561 = vadd.f32 %v487, %v560
    %v562 = vpop.f32.mrb[0].mxu0
    %563 = vmatprep.mubr.f32.mxu0 0.0
    %564 = vmatmul.mubr.f32.gmra.mrb[0].mxu0 %v452
    %v565 = vpop.f32.mrb[0].mxu0
    %v566 = vadd.f32 %v487, %v565
    %v567 = vpop.f32.mrb[0].mxu0
    %568 = vmatprep.mubr.f32.mxu0 0.0
    %569 = vmatmul.mubr.f32.gmra.mrb[0].mxu0 %v453
    %v570 = vpop.f32.mrb[0].mxu0
    %v571 = vadd.f32 %v487, %v570
    %v572 = vpop.f32.mrb[0].mxu0
    %573 = vmatprep.mubr.f32.mxu0 0.0
    %574 = vmatmul.mubr.f32.gmra.mrb[0].mxu0 %v454
    %v575 = vpop.f32.mrb[0].mxu0
    %v576 = vadd.f32 %v487, %v575
    %v577 = vpop.f32.mrb[0].mxu0
    %578 = vmatprep.mubr.f32.mxu0 0.0
    %579 = vmatmul.mubr.f32.gmra.mrb[0].mxu0 %v455
    %v580 = vpop.f32.mrb[0].mxu0
    %v581 = vadd.f32 %v487, %v580
    %v582 = vpop.f32.mrb[0].mxu0
    %583 = vmatprep.mubr.f32.mxu0 0.0
    %584 = vmatmul.mubr.f32.gmra.mrb[0].mxu0 %v456
    %v585 = vpop.f32.mrb[0].mxu0
    %v586 = vadd.f32 %v487, %v585
    %v587 = vpop.f32.mrb[0].mxu0
    %588 = vmatprep.mubr.f32.mxu0 0.0
    %589 = vmatmul.mubr.f32.gmra.mrb[0].mxu0 %v457
    %v590 = vpop.f32.mrb[0].mxu0
    %v591 = vadd.f32 %v487, %v590
    %v592 = vpop.f32.mrb[0].mxu0
    %593 = vmatprep.mubr.f32.mxu0 0.0
    %594 = vmatmul.mubr.f32.gmra.mrb[0].mxu0 %v458
    %v595 = vpop.f32.mrb[0].mxu0
    %v596 = vadd.f32 %v487, %v595
    %v597 = vpop.f32.mrb[0].mxu0
    %598 = vmatprep.mubr.f32.mxu0 0.0
    %599 = vmatmul.mubr.f32.gmra.mrb[0].mxu0 %v459
    %v600 = vpop.f32.mrb[0].mxu0
    %v601 = vadd.f32 %v487, %v600
    %v602 = vpop.f32.mrb[0].mxu0
    %603 = vmatprep.mubr.f32.mxu0 0.0
    %604 = vmatmul.mubr.f32.gmra.mrb[0].mxu0 %v460
    %v605 = vpop.f32.mrb[0].mxu0
    %v606 = vadd.f32 %v487, %v605
    %v607 = vpop.f32.mrb[0].mxu0
    %608 = vmatprep.mubr.f32.mxu0 0.0
    %609 = vmatmul.mubr.f32.gmra.mrb[0].mxu0 %v461
    %v610 = vpop.f32.mrb[0].mxu0
    %v611 = vadd.f32 %v487, %v610
    %v612 = vpop.f32.mrb[0].mxu0
    %613 = vmatprep.mubr.f32.mxu0 0.0
    %614 = vmatmul.mubr.f32.gmra.mrb[0].mxu0 %v462
    %v615 = vpop.f32.mrb[0].mxu0
    %v616 = vadd.f32 %v487, %v615
    %v617 = vpop.f32.mrb[0].mxu0
    %618 = vmatprep.mubr.f32.mxu0 0.0
    %619 = vmatmul.mubr.f32.gmra.mrb[0].mxu0 %v463
    %v620 = vpop.f32.mrb[0].mxu0
    %v621 = vadd.f32 %v487, %v620
    %v622 = vpop.f32.mrb[0].mxu0
    %623 = vmatprep.mubr.f32.mxu0 0.0
    %624 = vmatmul.mubr.f32.gmra.mrb[0].mxu0 %v464
    %v625 = vpop.f32.mrb[0].mxu0
    %v626 = vadd.f32 %v487, %v625
    %v627 = vpop.f32.mrb[0].mxu0
    %628 = vmatprep.mubr.f32.mxu0 0.0
    %629 = vmatmul.mubr.f32.gmra.mrb[0].mxu0 %v465
    %v630 = vpop.f32.mrb[0].mxu0
    %v631 = vadd.f32 %v487, %v630
    %v632 = vpop.f32.mrb[0].mxu0
    %633 = vdwg.mxu0
    %634 = vst [vmem:[#allocation10] sm:$0xff] %v556
    %635 = vst [vmem:[#allocation10 + $0x8] sm:$0xff] %v561
    %636 = vst [vmem:[#allocation10 + $0x10] sm:$0xff] %v566
    %637 = vst [vmem:[#allocation10 + $0x18] sm:$0xff] %v571
    %638 = vst [vmem:[#allocation10 + $0x20] sm:$0xff] %v576
    %639 = vst [vmem:[#allocation10 + $0x28] sm:$0xff] %v581
    %640 = vst [vmem:[#allocation10 + $0x30] sm:$0xff] %v586
    %641 = vst [vmem:[#allocation10 + $0x38] sm:$0xff] %v591
    %642 = vst [vmem:[#allocation10 + $0x40] sm:$0xff] %v596
    %643 = vst [vmem:[#allocation10 + $0x48] sm:$0xff] %v601
    %644 = vst [vmem:[#allocation10 + $0x50] sm:$0xff] %v606
    %645 = vst [vmem:[#allocation10 + $0x58] sm:$0xff] %v611
    %646 = vst [vmem:[#allocation10 + $0x60] sm:$0xff] %v616
    %647 = vst [vmem:[#allocation10 + $0x68] sm:$0xff] %v621
    %648 = vst [vmem:[#allocation10 + $0x70] sm:$0xff] %v626
    %649 = vst [vmem:[#allocation10 + $0x78] sm:$0xff] %v631
    // Predicated region
    $region46: #{tpu_custom_call.1} parent=1 // pred_check
      _
    $region47: #{tpu_custom_call.1} parent=1 // pred_check_branch
      %651 = sbr.rel (0) target = $region49
    $region48: #{tpu_custom_call.1} parent=1 // pred_region
      %s653 = ssub.s32 2048, 2048
      %654 = vsyncadd [#allocation4], %s653
      %s655 = sshll.u32 [#allocation10], 4
      %s656 = int_to_ptr.vmem [resolvable:$true] %s655
      %661 = dma.vmem_to_hbm [thread:$0]  %s656, 2048, %s7, [#allocation4], 128, 128, 8
    $region49: #{tpu_custom_call.1} parent=1 // pred_fallthru
      _
    // Predicated region
    $region50: #{tpu_custom_call.1} parent=1 // pred_check
      _
    $region51: #{tpu_custom_call.1} parent=1 // pred_check_branch
      %663 = sbr.rel (0) target = $region53
    $region52: #{tpu_custom_call.1} parent=1 // pred_region
      %664 = dma.done [#allocation4], 2048
    $region53: #{tpu_custom_call.1} parent=1 // pred_fallthru
      _
    %665 = vsyncpa [#allocation3], 1
    %666 = vsyncpa [#allocation6], 1
    %667 = vsyncpa [#allocation9], 1
    %668 = vsyncpa [#allocation4], 1

</llo_original>
